<compile_context>
chip_gen: v5e
topology: v5e:2x2
jax: 0.10.0
libtpu: 0.0.40
codegen_flags: <defaults>
</compile_context>

<pallas_src>
import functools

import jax
import jax.numpy as jnp
from jax.experimental import pallas as pl
from jax.experimental.pallas import tpu as pltpu

BN_EPS = 1e-5


def _round_up(x, m):
    return (x + m - 1) // m * m


def _pick_lane_tile(hwp, cin, x_itemsize, max_lanes=1024, x_budget_bytes=8 << 20):
    """Largest 128-multiple divisor of hwp that is <= max_lanes and keeps the
    double-buffered x block within budget."""
    q = hwp // 128
    best = 128
    for d in range(1, q + 1):
        if q % d:
            continue
        lanes = 128 * d
        if lanes > max_lanes:
            break
        if cin * lanes * x_itemsize * 2 > x_budget_bytes:
            break
        best = lanes
    return best


def _conv_stats_kernel(x_ref, w_ref, y_ref, psum_ref, psq_ref, *, compute_dtype):
    """Pass 1: 1x1-conv matmul tile + per-tile BN partial statistics.

    Grid: (num_co, N, num_hw); no reduction axis (full Cin per block).
      x_ref:    (Cin, THW)  activation tile (native dtype, cast in-kernel)
      w_ref:    (TCO, Cin)  weight tile (compute_dtype), resident across n/hw
      y_ref:    (TCO, THW)  conv output tile (bf16 by default)
      psum_ref: (TCO, 1)    f32 per-tile sum(y)   (from the f32 MXU result)
      psq_ref:  (TCO, 1)    f32 per-tile sum(y*y)
    """
    x = x_ref[...].astype(compute_dtype)                     # in-VMEM cast (VPU)
    w = w_ref[...]
    y = jnp.dot(w, x, preferred_element_type=jnp.float32)    # (TCO, THW) f32
    # Stats are taken from the f32 accumulator BEFORE the bf16 cast of y.
    psum_ref[...] = jnp.sum(y, axis=1, keepdims=True)
    psq_ref[...] = jnp.sum(y * y, axis=1, keepdims=True)
    y_ref[...] = y.astype(y_ref.dtype)


def _bn_relu_kernel(y_ref, s_ref, b_ref, o_ref):
    """Pass 2: fused BN affine + ReLU.  out = max(y * s + b, 0)."""
    y = y_ref[...].astype(jnp.float32)                       # (TCO, THW)
    o_ref[...] = jnp.maximum(y * s_ref[...] + b_ref[...], 0.0).astype(o_ref.dtype)


def conv1x1_block(x_nchw, weight, gamma, beta, *,
                  compute_dtype=jnp.bfloat16, y_dtype=jnp.bfloat16, eps=BN_EPS):
    """Conv1x1 -> BatchNorm2d (batch stats) -> ReLU.

    x_nchw: (N, Cin, H, W); weight: (Cout, Cin, 1, 1); gamma/beta: (Cout,).
    Returns (N, Cout, H, W) float32.
    """
    N, Cin, H, W = x_nchw.shape
    Cout = weight.shape[0]
    HW = H * W

    # ---- geometry: HW in lanes, channels in sublanes ------------------------
    x3 = x_nchw.reshape(N, Cin, HW)                     # free view of NCHW
    hwp = _round_up(HW, 128)
    if hwp != HW:
        # Zero lanes contribute 0 to the matmul and to the BN sums (divided by
        # the true N*H*W), so padding is stat-safe; sliced off at the end.
        x3 = jnp.pad(x3, ((0, 0), (0, 0), (0, hwp - HW)))

    x_itemsize = jnp.dtype(x3.dtype).itemsize
    thw = _pick_lane_tile(hwp, Cin, x_itemsize)
    num_hw = hwp // thw

    cout_p = _round_up(Cout, 8)                         # sublane padding only
    if cout_p <= 512:
        tco = cout_p                                    # single resident Cout tile
    else:
        tco = 256
        cout_p = _round_up(cout_p, tco)
    num_co = cout_p // tco

    w2 = weight.reshape(Cout, Cin).astype(compute_dtype)
    if cout_p != Cout:
        w2 = jnp.pad(w2, ((0, cout_p - Cout), (0, 0)))
    gamma_p = jnp.pad(gamma.astype(jnp.float32), (0, cout_p - Cout))
    beta_p = jnp.pad(beta.astype(jnp.float32), (0, cout_p - Cout))

    y_itemsize = jnp.dtype(y_dtype).itemsize
    grid = (num_co, N, num_hw)

    # ---- pass 1: conv matmul, bf16 y -> HBM + per-tile partial stats --------
    y, psum, psq = pl.pallas_call(
        functools.partial(_conv_stats_kernel, compute_dtype=compute_dtype),
        out_shape=(
            jax.ShapeDtypeStruct((N, cout_p, hwp), y_dtype),            # y
            jax.ShapeDtypeStruct((N, num_hw, cout_p, 1), jnp.float32),  # sum(y)
            jax.ShapeDtypeStruct((N, num_hw, cout_p, 1), jnp.float32),  # sum(y*y)
        ),
        grid_spec=pltpu.PrefetchScalarGridSpec(
            num_scalar_prefetch=0,
            grid=grid,
            in_specs=[
                # x re-read only num_co times (once for small Cout).
                pl.BlockSpec((None, Cin, thw), lambda co, n, hw: (n, 0, hw)),
                # Tiny weight tile; index varies only with the slowest axis.
                pl.BlockSpec((tco, Cin), lambda co, n, hw: (co, 0)),
            ],
            out_specs=(
                pl.BlockSpec((None, tco, thw), lambda co, n, hw: (n, co, hw)),
                pl.BlockSpec((None, None, tco, 1), lambda co, n, hw: (n, hw, co, 0)),
                pl.BlockSpec((None, None, tco, 1), lambda co, n, hw: (n, hw, co, 0)),
            ),
        ),
        compiler_params=pltpu.CompilerParams(
            # No reduction axis -> everything parallel (v7x megacore-friendly).
            dimension_semantics=("parallel", "parallel", "parallel"),
            vmem_limit_bytes=32 * 1024 * 1024,   # v7x-safe (64 MiB/TC total)
        ),
        cost_estimate=pl.CostEstimate(
            flops=2 * N * hwp * Cin * cout_p + 3 * N * hwp * cout_p,
            transcendentals=0,
            bytes_accessed=(num_co * N * Cin * hwp * x_itemsize
                            + cout_p * Cin * jnp.dtype(compute_dtype).itemsize
                            + N * cout_p * hwp * y_itemsize
                            + 2 * N * num_hw * cout_p * 4),
        ),
    )(x3, w2)

    # ---- global BN stats + fused scale/shift (tiny, plain JAX) --------------
    cnt = jnp.float32(N * HW)                            # true element count
    sum_y = jnp.sum(psum[..., 0], axis=(0, 1))           # (cout_p,)
    sum_y2 = jnp.sum(psq[..., 0], axis=(0, 1))
    mean = sum_y / cnt
    var = jnp.maximum(sum_y2 / cnt - mean * mean, 0.0)   # clamp tiny drift
    s = gamma_p * jax.lax.rsqrt(var + eps)
    b = beta_p - mean * s
    s2 = s.reshape(cout_p, 1)                            # channels in sublanes
    b2 = b.reshape(cout_p, 1)

    # ---- pass 2: normalize + affine + ReLU (large lane-dense blocks) --------
    out = pl.pallas_call(
        _bn_relu_kernel,
        out_shape=jax.ShapeDtypeStruct((N, cout_p, hwp), jnp.float32),
        grid_spec=pltpu.PrefetchScalarGridSpec(
            num_scalar_prefetch=0,
            grid=grid,
            in_specs=[
                pl.BlockSpec((None, tco, thw), lambda co, n, hw: (n, co, hw)),
                # s/b resident across the whole grid (index changes only with co).
                pl.BlockSpec((tco, 1), lambda co, n, hw: (co, 0)),
                pl.BlockSpec((tco, 1), lambda co, n, hw: (co, 0)),
            ],
            out_specs=pl.BlockSpec((None, tco, thw), lambda co, n, hw: (n, co, hw)),
        ),
        compiler_params=pltpu.CompilerParams(
            dimension_semantics=("parallel", "parallel", "parallel"),
            vmem_limit_bytes=32 * 1024 * 1024,
        ),
        cost_estimate=pl.CostEstimate(
            flops=3 * N * hwp * cout_p,
            transcendentals=0,
            bytes_accessed=N * cout_p * hwp * (y_itemsize + 4) + 2 * cout_p * 4,
        ),
    )(y, s2, b2)

    if cout_p != Cout or hwp != HW:
        out = out[:, :Cout, :HW]
    return out.reshape(N, Cout, H, W)          # already NCHW — no transpose


def _reference(x_nchw, weight, gamma, beta, *,
               matmul_dtype=jnp.float32, y_store_dtype=None, eps=BN_EPS):
    """Pure-JAX reference of Conv1x1.forward (training-mode BN)."""
    Cout, Cin = weight.shape[0], weight.shape[1]
    w2d = weight.reshape(Cout, Cin)
    y = jnp.einsum("nchw,oc->nohw",
                   x_nchw.astype(matmul_dtype), w2d.astype(matmul_dtype),
                   preferred_element_type=jnp.float32)
    mean = jnp.mean(y, axis=(0, 2, 3), keepdims=True)
    var = jnp.mean((y - mean) ** 2, axis=(0, 2, 3), keepdims=True)
    if y_store_dtype is not None:
        y = y.astype(y_store_dtype).astype(jnp.float32)   # mimic bf16 intermediate
    y_hat = (y - mean) * jax.lax.rsqrt(var + eps)
    out = y_hat * gamma.reshape(1, -1, 1, 1) + beta.reshape(1, -1, 1, 1)
    return jnp.maximum(out, 0.0)


if __name__ == "__main__":
    key = jax.random.PRNGKey(0)
    k_x, k_w, k_g, k_b = jax.random.split(key, 4)

    # HW = 32*40 = 1280 -> two 640-lane tiles; N=2 -> 4 stats tiles combined.
    N, Cin, Cout, H, W = 2, 8, 16, 32, 40

    x = jax.random.normal(k_x, (N, Cin, H, W), dtype=jnp.float32)
    # nn.Conv2d weight shape: (Cout, Cin, 1, 1)
    weight = 0.1 * jax.random.normal(k_w, (Cout, Cin, 1, 1), dtype=jnp.float32)
    gamma = 1.0 + 0.05 * jax.random.normal(k_g, (Cout,), dtype=jnp.float32)
    beta = 0.05 * jax.random.normal(k_b, (Cout,), dtype=jnp.float32)

    fn = jax.jit(lambda x_, w_, g_, b_: conv1x1_block(x_, w_, g_, b_))
    out = jax.block_until_ready(fn(x, weight, gamma, beta))
    assert out.shape == (N, Cout, H, W)

    # Tight check vs a reference that mirrors the kernel numerics
    # (bf16 matmul inputs, bf16-stored conv output, f32 batch stats).
    ref_match = _reference(x, weight, gamma, beta,
                           matmul_dtype=jnp.bfloat16, y_store_dtype=jnp.bfloat16)
    assert jnp.allclose(out, ref_match, atol=1e-4, rtol=1e-4), \
        "mismatch vs matched (bf16) reference"

    # Loose check vs the pure-f32 (PyTorch-equivalent) math: only bf16
    # rounding of the matmul inputs / intermediate separates the two.
    ref_f32 = _reference(x, weight, gamma, beta, matmul_dtype=jnp.float32)
    assert jnp.allclose(out, ref_f32, atol=3e-2, rtol=3e-2), \
        "mismatch vs f32 reference"

    print("KERNEL_OK")
</pallas_src>

<mosaic_0001>
module attributes {stable_mosaic.version = 11 : i64} {
  func.func @_conv_stats_kernel(%arg0: i32, %arg1: i32, %arg2: i32, %arg3: memref<1x8x640xf32, #tpu.memory_space<vmem>>, %arg4: memref<16x8xbf16, #tpu.memory_space<vmem>>, %arg5: memref<1x16x640xbf16, #tpu.memory_space<vmem>>, %arg6: memref<1x1x16x1xf32, #tpu.memory_space<vmem>>, %arg7: memref<1x1x16x1xf32, #tpu.memory_space<vmem>>) attributes {dimension_semantics = [#tpu.dimension_semantics<parallel>, #tpu.dimension_semantics<parallel>, #tpu.dimension_semantics<parallel>], iteration_bounds = array<i64: 1, 2, 2>, scalar_prefetch = 0 : i64, scratch_operands = 0 : i64, tpu.core_type = #tpu.core_type<tc>, window_params = [{transform_indices = @transform_0, window_bounds = array<i64: 1, 8, 640>}, {transform_indices = @transform_1, window_bounds = array<i64: 16, 8>}, {transform_indices = @transform_2, window_bounds = array<i64: 1, 16, 640>}, {transform_indices = @transform_3, window_bounds = array<i64: 1, 1, 16, 1>}, {transform_indices = @transform_4, window_bounds = array<i64: 1, 1, 16, 1>}]} {
    %c0 = arith.constant 0 : index
    %c0_0 = arith.constant 0 : index
    %c0_1 = arith.constant 0 : index
    %0 = vector.load %arg3[%c0, %c0_0, %c0_1] : memref<1x8x640xf32, #tpu.memory_space<vmem>>, vector<1x8x640xf32>
    %1 = vector.shape_cast %0 : vector<1x8x640xf32> to vector<8x640xf32>
    %2 = arith.truncf %1 : vector<8x640xf32> to vector<8x640xbf16>
    %c0_2 = arith.constant 0 : index
    %c0_3 = arith.constant 0 : index
    %3 = vector.load %arg4[%c0_2, %c0_3] : memref<16x8xbf16, #tpu.memory_space<vmem>>, vector<16x8xbf16>
    %cst = arith.constant dense<0.000000e+00> : vector<16x640xf32>
    %4 = tpu.matmul %3, %2, %cst {dimension_numbers = #tpu.dot_dimension_numbers<[1], [0], [0], [1], [0, 0, 1, 1], [], []>} : vector<16x8xbf16>, vector<8x640xbf16>, vector<16x640xf32> -> vector<16x640xf32>
    %cst_4 = arith.constant dense<0.000000e+00> : vector<16xf32>
    %5 = vector.multi_reduction <add>, %4, %cst_4 [1] : vector<16x640xf32> to vector<16xf32>
    %6 = vector.shape_cast %5 : vector<16xf32> to vector<16x1xf32>
    %c0_5 = arith.constant 0 : index
    %c0_6 = arith.constant 0 : index
    %c0_7 = arith.constant 0 : index
    %c0_8 = arith.constant 0 : index
    %7 = vector.load %arg6[%c0_5, %c0_6, %c0_7, %c0_8] : memref<1x1x16x1xf32, #tpu.memory_space<vmem>>, vector<1x1x16x1xf32>
    %8 = vector.shape_cast %7 : vector<1x1x16x1xf32> to vector<16x1xf32>
    %9 = vector.shape_cast %6 : vector<16x1xf32> to vector<1x1x16x1xf32>
    tpu.vector_store %arg6[%c0_5, %c0_6, %c0_7, %c0_8], %9 {strides = array<i32>} : memref<1x1x16x1xf32, #tpu.memory_space<vmem>>, vector<1x1x16x1xf32>,
    %10 = arith.mulf %4, %4 : vector<16x640xf32>
    %cst_9 = arith.constant dense<0.000000e+00> : vector<16xf32>
    %11 = vector.multi_reduction <add>, %10, %cst_9 [1] : vector<16x640xf32> to vector<16xf32>
    %12 = vector.shape_cast %11 : vector<16xf32> to vector<16x1xf32>
    %c0_10 = arith.constant 0 : index
    %c0_11 = arith.constant 0 : index
    %c0_12 = arith.constant 0 : index
    %c0_13 = arith.constant 0 : index
    %13 = vector.load %arg7[%c0_10, %c0_11, %c0_12, %c0_13] : memref<1x1x16x1xf32, #tpu.memory_space<vmem>>, vector<1x1x16x1xf32>
    %14 = vector.shape_cast %13 : vector<1x1x16x1xf32> to vector<16x1xf32>
    %15 = vector.shape_cast %12 : vector<16x1xf32> to vector<1x1x16x1xf32>
    tpu.vector_store %arg7[%c0_10, %c0_11, %c0_12, %c0_13], %15 {strides = array<i32>} : memref<1x1x16x1xf32, #tpu.memory_space<vmem>>, vector<1x1x16x1xf32>,
    %16 = arith.truncf %4 : vector<16x640xf32> to vector<16x640xbf16>
    %c0_14 = arith.constant 0 : index
    %c0_15 = arith.constant 0 : index
    %c0_16 = arith.constant 0 : index
    %17 = vector.load %arg5[%c0_14, %c0_15, %c0_16] : memref<1x16x640xbf16, #tpu.memory_space<vmem>>, vector<1x16x640xbf16>
    %18 = vector.shape_cast %17 : vector<1x16x640xbf16> to vector<16x640xbf16>
    %19 = vector.shape_cast %16 : vector<16x640xbf16> to vector<1x16x640xbf16>
    tpu.vector_store %arg5[%c0_14, %c0_15, %c0_16], %19 {strides = array<i32>} : memref<1x16x640xbf16, #tpu.memory_space<vmem>>, vector<1x16x640xbf16>,
    return
  }
  func.func @transform_0(%arg0: i32, %arg1: i32, %arg2: i32) -> (i32, i32, i32) {
    %c0_i32 = arith.constant 0 : i32
    %c0_i32_0 = arith.constant 0 : i32
    return %arg1, %c0_i32, %arg2 : i32, i32, i32
  }
  func.func @transform_1(%arg0: i32, %arg1: i32, %arg2: i32) -> (i32, i32) {
    %c0_i32 = arith.constant 0 : i32
    %c0_i32_0 = arith.constant 0 : i32
    return %arg0, %c0_i32 : i32, i32
  }
  func.func @transform_2(%arg0: i32, %arg1: i32, %arg2: i32) -> (i32, i32, i32) {
    %c0_i32 = arith.constant 0 : i32
    return %arg1, %arg0, %arg2 : i32, i32, i32
  }
  func.func @transform_3(%arg0: i32, %arg1: i32, %arg2: i32) -> (i32, i32, i32, i32) {
    %c0_i32 = arith.constant 0 : i32
    %c0_i32_0 = arith.constant 0 : i32
    return %arg1, %arg2, %arg0, %c0_i32 : i32, i32, i32, i32
  }
  func.func @transform_4(%arg0: i32, %arg1: i32, %arg2: i32) -> (i32, i32, i32, i32) {
    %c0_i32 = arith.constant 0 : i32
    %c0_i32_0 = arith.constant 0 : i32
    return %arg1, %arg2, %arg0, %c0_i32 : i32, i32, i32, i32
  }
}

module attributes {stable_mosaic.version = 11 : i64} {
  func.func @_bn_relu_kernel(%arg0: i32, %arg1: i32, %arg2: i32, %arg3: memref<1x16x640xbf16, #tpu.memory_space<vmem>>, %arg4: memref<16x1xf32, #tpu.memory_space<vmem>>, %arg5: memref<16x1xf32, #tpu.memory_space<vmem>>, %arg6: memref<1x16x640xf32, #tpu.memory_space<vmem>>) attributes {dimension_semantics = [#tpu.dimension_semantics<parallel>, #tpu.dimension_semantics<parallel>, #tpu.dimension_semantics<parallel>], iteration_bounds = array<i64: 1, 2, 2>, scalar_prefetch = 0 : i64, scratch_operands = 0 : i64, tpu.core_type = #tpu.core_type<tc>, window_params = [{transform_indices = @transform_0, window_bounds = array<i64: 1, 16, 640>}, {transform_indices = @transform_1, window_bounds = array<i64: 16, 1>}, {transform_indices = @transform_2, window_bounds = array<i64: 16, 1>}, {transform_indices = @transform_3, window_bounds = array<i64: 1, 16, 640>}]} {
    %c0 = arith.constant 0 : index
    %c0_0 = arith.constant 0 : index
    %c0_1 = arith.constant 0 : index
    %0 = vector.load %arg3[%c0, %c0_0, %c0_1] : memref<1x16x640xbf16, #tpu.memory_space<vmem>>, vector<1x16x640xbf16>
    %1 = vector.shape_cast %0 : vector<1x16x640xbf16> to vector<16x640xbf16>
    %2 = arith.extf %1 : vector<16x640xbf16> to vector<16x640xf32>
    %c0_2 = arith.constant 0 : index
    %c0_3 = arith.constant 0 : index
    %3 = vector.load %arg4[%c0_2, %c0_3] : memref<16x1xf32, #tpu.memory_space<vmem>>, vector<16x1xf32>
    %4 = vector.broadcast %3 : vector<16x1xf32> to vector<16x640xf32>
    %5 = arith.mulf %2, %4 : vector<16x640xf32>
    %c0_4 = arith.constant 0 : index
    %c0_5 = arith.constant 0 : index
    %6 = vector.load %arg5[%c0_4, %c0_5] : memref<16x1xf32, #tpu.memory_space<vmem>>, vector<16x1xf32>
    %7 = vector.broadcast %6 : vector<16x1xf32> to vector<16x640xf32>
    %8 = arith.addf %5, %7 : vector<16x640xf32>
    %cst = arith.constant 0.000000e+00 : f32
    %9 = vector.broadcast %cst : f32 to vector<16x640xf32>
    %10 = arith.maximumf %8, %9 : vector<16x640xf32>
    %c0_6 = arith.constant 0 : index
    %c0_7 = arith.constant 0 : index
    %c0_8 = arith.constant 0 : index
    %11 = vector.load %arg6[%c0_6, %c0_7, %c0_8] : memref<1x16x640xf32, #tpu.memory_space<vmem>>, vector<1x16x640xf32>
    %12 = vector.shape_cast %11 : vector<1x16x640xf32> to vector<16x640xf32>
    %13 = vector.shape_cast %10 : vector<16x640xf32> to vector<1x16x640xf32>
    tpu.vector_store %arg6[%c0_6, %c0_7, %c0_8], %13 {strides = array<i32>} : memref<1x16x640xf32, #tpu.memory_space<vmem>>, vector<1x16x640xf32>,
    return
  }
  func.func @transform_0(%arg0: i32, %arg1: i32, %arg2: i32) -> (i32, i32, i32) {
    %c0_i32 = arith.constant 0 : i32
    return %arg1, %arg0, %arg2 : i32, i32, i32
  }
  func.func @transform_1(%arg0: i32, %arg1: i32, %arg2: i32) -> (i32, i32) {
    %c0_i32 = arith.constant 0 : i32
    %c0_i32_0 = arith.constant 0 : i32
    return %arg0, %c0_i32 : i32, i32
  }
  func.func @transform_2(%arg0: i32, %arg1: i32, %arg2: i32) -> (i32, i32) {
    %c0_i32 = arith.constant 0 : i32
    %c0_i32_0 = arith.constant 0 : i32
    return %arg0, %c0_i32 : i32, i32
  }
  func.func @transform_3(%arg0: i32, %arg1: i32, %arg2: i32) -> (i32, i32, i32) {
    %c0_i32 = arith.constant 0 : i32
    return %arg1, %arg0, %arg2 : i32, i32, i32
  }
}

</mosaic_0001>

<llo_original>
// kernel: _lambda_.2
$region0: #{_lambda_.2}
  #allocation0 [shape = 'u32[]', space=smem, size = 0x4, offset = 0x4, fixed_abs, tag = 'smem constant byte address 0x4 - core index']
  #allocation1 [shape = 'u32[72,128]{1,0:T(1,128)}', space=vmem, size = 0x9000, scoped, tag = 'internal scratch']
  %s0 = inlined_call_operand.vmem [shape: f32[2,8,1280], index: 0, kind: input, shape index: {}]
  %s1 = inlined_call_operand.vmem [shape: bf16[16,8], index: 1, kind: input, shape index: {}]
  %s2 = inlined_call_operand.vmem [shape: bf16[2,16,1280], index: 2, kind: output, shape index: {0}]
  %s3 = inlined_call_operand.vmem [shape: f32[2,2,16,1], index: 3, kind: output, shape index: {1}]
  %s4 = inlined_call_operand.vmem [shape: f32[2,2,16,1], index: 4, kind: output, shape index: {2}]
  %5 = xla_tuple %s2, %s3, %s4
  %s6 = sld [smem:[#allocation0]]
  $region79: #{_lambda_.2} parent=0
    _
  %s8 = ssub.s32 1, %s6
  %s9 = scalar_select 0, %s8, %s6
  $region1: #{_lambda_.2} parent=0
    #allocation2 [shape = 'u8[40960]{0}', space=vmem, size = 0xa000, scoped, tag = 'output window, operand 0']
    loop: start=0, step=1, limit=6
    $region2: #{_lambda_.2} parent=1 // loop_pre_header
      _
    $region3: #{_lambda_.2} parent=1 // loop_header
      %s11 = sphi 0, %s15
      %p12 = scmp.ge.s32.totalorder %s11, 6
      %s18 = sphi 0, %s37
      %s19 = sphi 0, %s33
      %s20 = sphi 0, %s29
      %s21 = sphi 0, %s18
      %s22 = sphi 0, %s19
      %s23 = sphi 0, %s20
      %s24 = sphi 0, %s21
      %s25 = sphi 0, %s22
      %s26 = sphi 0, %s23
      %s42 = sphi 0, %s44
      %s45 = sphi 0, %s42
      %s46 = sphi 0, %s45
      %s62 = sphi 0, %s46
      %s68 = sphi 0, %s70
      %s71 = sphi 0, %s68
      %s72 = sphi 0, %s71
      %s88 = sphi 0, %s72
      %s98 = sphi 0, %s100
      %s101 = sphi 0, %s98
      %s102 = sphi 0, %s101
      %s118 = sphi 0, %s102
      %s128 = sphi 0, %s130
      %s131 = sphi 0, %s128
      %s132 = sphi 0, %s131
      %s148 = sphi 0, %s132
      %s158 = sphi 0, %s160
      %s161 = sphi 0, %s158
      %s162 = sphi 0, %s161
      %s178 = sphi 0, %s162
    $region4: #{_lambda_.2} parent=1 // loop_header_branch
      %14 = sbr.rel (%p12) target = $region8
    $region5: #{_lambda_.2} parent=1 // loop_body
      %s16 = ssub.s32 %s11, 1
      %s17 = ssub.s32 %s11, 2
      %s27 = sadd.s32 1, %s20
      %p28 = scmp.ge.s32.totalorder %s27, 2
      %s29 = scalar_select %p28, 0, %s27
      %s30 = sadd.s32 1, %s19
      %s31 = scalar_select %p28, %s30, %s19
      %p32 = scmp.ge.s32.totalorder %s31, 2
      %s33 = scalar_select %p32, 0, %s31
      %s34 = sadd.s32 1, %s18
      %s35 = scalar_select %p32, %s34, %s18
      %p36 = scmp.ge.s32.totalorder %s35, 1
      %s37 = scalar_select %p36, 0, %s35
      %s38 = ssub.s32 %s19, %s33
      %s39 = ssub.s32 %s20, %s29
      %s40 = sor.u32 %s38, %s39
      %p41 = scmp.eq.s32.totalorder %s40, 0
      %s43 = sadd.s32 %s42, 1
      %s44 = scalar_select %p41, %s42, %s43
      %p47 = pneg %p41
      %p48 = scmp.eq.s32.totalorder %s11, 3
      %p49 = por %p47, %p48
      %p50 = scmp.ne.s32.totalorder %s42, %s45
      %p51 = scmp.eq.s32.totalorder %s11, 0
      %p52 = por %p50, %p51
      %p53 = scmp.ne.s32.totalorder %s42, %s45
      %p54 = scmp.eq.s32.totalorder %s16, 3
      %p55 = por %p53, %p54
      %p56 = scmp.ne.s32.totalorder %s45, %s46
      %p57 = scmp.eq.s32.totalorder %s16, 0
      %p58 = por %p56, %p57
      %p59 = scmp.ne.s32.totalorder %s45, %s46
      %p60 = scmp.eq.s32.totalorder %s17, 3
      %p61 = por %p59, %p60
      %p63 = scmp.ne.s32.totalorder %s46, %s62
      %p64 = scmp.eq.s32.totalorder %s17, 0
      %p65 = por %p63, %p64
      %s66 = ssub.s32 %s18, %s37
      %p67 = scmp.eq.s32.totalorder %s66, 0
      %s69 = sadd.s32 %s68, 1
      %s70 = scalar_select %p67, %s68, %s69
      %p73 = pneg %p67
      %p74 = scmp.eq.s32.totalorder %s11, 3
      %p75 = por %p73, %p74
      %p76 = scmp.ne.s32.totalorder %s68, %s71
      %p77 = scmp.eq.s32.totalorder %s11, 0
      %p78 = por %p76, %p77
      %p79 = scmp.ne.s32.totalorder %s68, %s71
      %p80 = scmp.eq.s32.totalorder %s16, 3
      %p81 = por %p79, %p80
      %p82 = scmp.ne.s32.totalorder %s71, %s72
      %p83 = scmp.eq.s32.totalorder %s16, 0
      %p84 = por %p82, %p83
      %p85 = scmp.ne.s32.totalorder %s71, %s72
      %p86 = scmp.eq.s32.totalorder %s17, 3
      %p87 = por %p85, %p86
      %p89 = scmp.ne.s32.totalorder %s72, %s88
      %p90 = scmp.eq.s32.totalorder %s17, 0
      %p91 = por %p89, %p90
      %s92 = ssub.s32 %s19, %s33
      %s93 = ssub.s32 %s18, %s37
      %s94 = sor.u32 %s92, %s93
      %s95 = ssub.s32 %s20, %s29
      %s96 = sor.u32 %s94, %s95
      %p97 = scmp.eq.s32.totalorder %s96, 0
      %s99 = sadd.s32 %s98, 1
      %s100 = scalar_select %p97, %s98, %s99
      %p103 = pneg %p97
      %p104 = scmp.eq.s32.totalorder %s11, 3
      %p105 = por %p103, %p104
      %p106 = scmp.ne.s32.totalorder %s98, %s101
      %p107 = scmp.eq.s32.totalorder %s11, 0
      %p108 = por %p106, %p107
      %p109 = scmp.ne.s32.totalorder %s98, %s101
      %p110 = scmp.eq.s32.totalorder %s16, 3
      %p111 = por %p109, %p110
      %p112 = scmp.ne.s32.totalorder %s101, %s102
      %p113 = scmp.eq.s32.totalorder %s16, 0
      %p114 = por %p112, %p113
      %p115 = scmp.ne.s32.totalorder %s101, %s102
      %p116 = scmp.eq.s32.totalorder %s17, 3
      %p117 = por %p115, %p116
      %p119 = scmp.ne.s32.totalorder %s102, %s118
      %p120 = scmp.eq.s32.totalorder %s17, 0
      %p121 = por %p119, %p120
      %s122 = ssub.s32 %s19, %s33
      %s123 = ssub.s32 %s20, %s29
      %s124 = sor.u32 %s122, %s123
      %s125 = ssub.s32 %s18, %s37
      %s126 = sor.u32 %s124, %s125
      %p127 = scmp.eq.s32.totalorder %s126, 0
      %s129 = sadd.s32 %s128, 1
      %s130 = scalar_select %p127, %s128, %s129
      %p133 = pneg %p127
      %p134 = scmp.eq.s32.totalorder %s11, 3
      %p135 = por %p133, %p134
      %p136 = scmp.ne.s32.totalorder %s128, %s131
      %p137 = scmp.eq.s32.totalorder %s11, 0
      %p138 = por %p136, %p137
      %p139 = scmp.ne.s32.totalorder %s128, %s131
      %p140 = scmp.eq.s32.totalorder %s16, 3
      %p141 = por %p139, %p140
      %p142 = scmp.ne.s32.totalorder %s131, %s132
      %p143 = scmp.eq.s32.totalorder %s16, 0
      %p144 = por %p142, %p143
      %p145 = scmp.ne.s32.totalorder %s131, %s132
      %p146 = scmp.eq.s32.totalorder %s17, 3
      %p147 = por %p145, %p146
      %p149 = scmp.ne.s32.totalorder %s132, %s148
      %p150 = scmp.eq.s32.totalorder %s17, 0
      %p151 = por %p149, %p150
      %s152 = ssub.s32 %s19, %s33
      %s153 = ssub.s32 %s20, %s29
      %s154 = sor.u32 %s152, %s153
      %s155 = ssub.s32 %s18, %s37
      %s156 = sor.u32 %s154, %s155
      %p157 = scmp.eq.s32.totalorder %s156, 0
      %s159 = sadd.s32 %s158, 1
      %s160 = scalar_select %p157, %s158, %s159
      %p163 = pneg %p157
      %p164 = scmp.eq.s32.totalorder %s11, 3
      %p165 = por %p163, %p164
      %p166 = scmp.ne.s32.totalorder %s158, %s161
      %p167 = scmp.eq.s32.totalorder %s11, 0
      %p168 = por %p166, %p167
      %p169 = scmp.ne.s32.totalorder %s158, %s161
      %p170 = scmp.eq.s32.totalorder %s16, 3
      %p171 = por %p169, %p170
      %p172 = scmp.ne.s32.totalorder %s161, %s162
      %p173 = scmp.eq.s32.totalorder %s16, 0
      %p174 = por %p172, %p173
      %p175 = scmp.ne.s32.totalorder %s161, %s162
      %p176 = scmp.eq.s32.totalorder %s17, 3
      %p177 = por %p175, %p176
      %p179 = scmp.ne.s32.totalorder %s162, %s178
      %p180 = scmp.eq.s32.totalorder %s17, 0
      %p181 = por %p179, %p180
      %p182 = scmp.le.s32.totalorder 1, %s11
      %p183 = scmp.lt.s32.totalorder %s11, 5
      %p184 = pnand %p182, %p183
      %p185 = pneg %p184
      // Predicated region
      $region9: #{_lambda_.2} parent=5 // pred_check
        _
      $region10: #{_lambda_.2} parent=5 // pred_check_branch
        %187 = sbr.rel (%p184) target = $region12
      $region11: #{_lambda_.2} parent=5 // pred_region
        %s188 = ssub.s32 %s11, 1
        // Predicated region
        $region13: #{_lambda_.2} parent=11 // pred_check
          %p189 = pneg %p84
        $region14: #{_lambda_.2} parent=11 // pred_check_branch
          %191 = sbr.rel (%p189) target = $region16
        $region15: #{_lambda_.2} parent=11 // pred_region
          %s192 = smul.u32 2, %s21
          %p193 = scmp.lt.s32.totalorder %s192, 1
          %s194 = scalar_select %p193, %s192, 1
          %s195 = smul.addr %s194, 4
          %s196 = scalar_lea.vmem %s1, %s195
          %s197 = smul.u32 2, %s21
        $region16: #{_lambda_.2} parent=11 // pred_fallthru
          _
      $region12: #{_lambda_.2} parent=5 // pred_fallthru
        _
      %p198 = scmp.lt.s32.totalorder %s11, 4
      // Predicated region
      $region17: #{_lambda_.2} parent=5 // pred_check
        %p199 = pneg %p198
      $region18: #{_lambda_.2} parent=5 // pred_check_branch
        %201 = sbr.rel (%p199) target = $region20
      $region19: #{_lambda_.2} parent=5 // pred_region
        // Predicated region
        $region21: #{_lambda_.2} parent=19 // pred_check
          %p202 = pneg %p52
        $region22: #{_lambda_.2} parent=19 // pred_check_branch
          %204 = sbr.rel (%p202) target = $region24
        $region23: #{_lambda_.2} parent=19 // pred_region
          %s205 = smul.u32 5, %s20
          %p206 = scmp.lt.s32.totalorder %s19, 1
          %s207 = scalar_select %p206, %s19, 1
          %p208 = scmp.lt.s32.totalorder %s205, 9
          %s209 = scalar_select %p208, %s205, 9
          %s210 = smul.addr %s207, 10
          %s211 = sadd.s32 %s209, %s210
          %s212 = smul.addr %s211, 8
          %s213 = scalar_lea.vmem %s0, %s212
          %s214 = smul.u32 5, %s20
        $region24: #{_lambda_.2} parent=19 // pred_fallthru
          _
      $region20: #{_lambda_.2} parent=5 // pred_fallthru
        _
      %p215 = scmp.le.s32.totalorder 1, %s11
      %p216 = scmp.lt.s32.totalorder %s11, 5
      %p217 = pnand %p215, %p216
      %p218 = pneg %p217
      // Predicated region
      $region25: #{_lambda_.2} parent=5 // pred_check
        _
      $region26: #{_lambda_.2} parent=5 // pred_check_branch
        %220 = sbr.rel (%p217) target = $region28
      $region27: #{_lambda_.2} parent=5 // pred_region
        %s221 = ssub.s32 %s11, 1
        %s222 = smul.u32 5, %s23
        %p223 = scmp.lt.s32.totalorder %s22, 1
        %s224 = scalar_select %p223, %s22, 1
        %p225 = scmp.lt.s32.totalorder %s222, 9
        %s226 = scalar_select %p225, %s222, 9
        %s227 = smul.addr %s224, 10
        %s228 = sadd.s32 %s226, %s227
        %s229 = smul.addr %s228, 8
        %s230 = scalar_lea.vmem %s0, %s229
        %p231 = pneg %p58
        %p232 = pneg %p55
        %s233 = smul.u32 2, %s21
        %p234 = scmp.lt.s32.totalorder %s233, 1
        %s235 = scalar_select %p234, %s233, 1
        %s236 = smul.addr %s235, 4
        %s237 = scalar_lea.vmem %s1, %s236
        %p238 = pneg %p84
        %p239 = pneg %p81
        %p240 = pneg %p114
        %p241 = pneg %p111
        %s242 = sand.u32 %s101, 1
        %s243 = sand.u32 %s101, 1
        %s244 = smul.addr %s243, 40
        %s245 = scalar_lea.vmem [#allocation2], %s244
        %p246 = pneg %p144
        %p247 = pneg %p141
        %s248 = smul.u32 2, %s21
        %p249 = scmp.lt.s32.totalorder %s22, 1
        %s250 = scalar_select %p249, %s22, 1
        %p251 = scmp.lt.s32.totalorder %s23, 1
        %s252 = scalar_select %p251, %s23, 1
        %p253 = scmp.lt.s32.totalorder %s248, 1
        %s254 = scalar_select %p253, %s248, 1
        %s255 = smul.addr %s252, 2
        %s256 = sadd.s32 %s254, %s255
        %s257 = smul.addr %s250, 4
        %s258 = sadd.s32 %s256, %s257
        %s259 = smul.addr %s258, 8
        %s260 = scalar_lea.vmem %s3, %s259
        %p261 = pneg %p174
        %p262 = pneg %p171
        %s263 = smul.u32 2, %s21
        %p264 = scmp.lt.s32.totalorder %s22, 1
        %s265 = scalar_select %p264, %s22, 1
        %p266 = scmp.lt.s32.totalorder %s23, 1
        %s267 = scalar_select %p266, %s23, 1
        %p268 = scmp.lt.s32.totalorder %s263, 1
        %s269 = scalar_select %p268, %s263, 1
        %s270 = smul.addr %s267, 2
        %s271 = sadd.s32 %s269, %s270
        %s272 = smul.addr %s265, 4
        %s273 = sadd.s32 %s271, %s272
        %s274 = smul.addr %s273, 8
        %s275 = scalar_lea.vmem %s4, %s274
        %s276 = smul.u32 5, %s23
        %p277 = scmp.lt.s32.totalorder %s22, 1
        %s278 = scalar_select %p277, %s22, 1
        %p279 = scmp.lt.s32.totalorder %s276, 9
        %s280 = scalar_select %p279, %s276, 9
        %s281 = smul.addr %s278, 10
        %s282 = sadd.s32 %s280, %s281
        %s283 = smul.addr %s282, 8
        %s284 = scalar_lea.vmem %s0, %s283
        %s285 = smul.u32 5, %s23
        %s286 = smul.u32 2, %s21
        %p287 = scmp.lt.s32.totalorder %s286, 1
        %s288 = scalar_select %p287, %s286, 1
        %s289 = smul.addr %s288, 4
        %s290 = scalar_lea.vmem %s1, %s289
        %s291 = smul.u32 2, %s21
        %s292 = smul.u32 2, %s21
        %s293 = smul.u32 5, %s23
        %s294 = smul.u32 2, %s21
        %p295 = scmp.lt.s32.totalorder %s22, 1
        %s296 = scalar_select %p295, %s22, 1
        %p297 = scmp.lt.s32.totalorder %s23, 1
        %s298 = scalar_select %p297, %s23, 1
        %p299 = scmp.lt.s32.totalorder %s294, 1
        %s300 = scalar_select %p299, %s294, 1
        %s301 = smul.addr %s298, 2
        %s302 = sadd.s32 %s300, %s301
        %s303 = smul.addr %s296, 4
        %s304 = sadd.s32 %s302, %s303
        %s305 = smul.addr %s304, 8
        %s306 = scalar_lea.vmem %s3, %s305
        %s307 = smul.u32 2, %s21
        %s308 = smul.u32 2, %s21
        %p309 = scmp.lt.s32.totalorder %s22, 1
        %s310 = scalar_select %p309, %s22, 1
        %p311 = scmp.lt.s32.totalorder %s23, 1
        %s312 = scalar_select %p311, %s23, 1
        %p313 = scmp.lt.s32.totalorder %s308, 1
        %s314 = scalar_select %p313, %s308, 1
        %s315 = smul.addr %s312, 2
        %s316 = sadd.s32 %s314, %s315
        %s317 = smul.addr %s310, 4
        %s318 = sadd.s32 %s316, %s317
        %s319 = smul.addr %s318, 8
        %s320 = scalar_lea.vmem %s4, %s319
        %s321 = smul.u32 2, %s21
        %v323 = vld [vmem:[%s284] sm:$0xff]
        %v324 = vld [vmem:[%s284 + $0x8] sm:$0xff]
        %v325 = vld [vmem:[%s284 + $0x10] sm:$0xff]
        %v326 = vld [vmem:[%s284 + $0x18] sm:$0xff]
        %v327 = vld [vmem:[%s284 + $0x20] sm:$0xff]
        %v328 = vpack.c.bf16 %v323, %v323
        %v329 = vpack.c.bf16 %v324, %v324
        %v330 = vpack.c.bf16 %v325, %v325
        %v331 = vpack.c.bf16 %v326, %v326
        %v332 = vpack.c.bf16 %v327, %v327
        %v333 = vld [vmem:[%s290] sm:$0xf]
        %v334 = vld [vmem:[%s290 + $0x4] sm:$0xf]
        %v337 = vunpack.c.l.b16 %v333
        %v338 = vunpack.c.l.b16 %v334
        %v339 = vpack.c.b16 %v338, %v337
        %vm340 = vcmask 64512
        %v342 = vsel %vm340, %v339, 0
        %vm344 = vcmask 1043456
        %v346 = vsel %vm344, %v328, 0
        %v349 = vsel %vm344, %v329, 0
        %v352 = vsel %vm344, %v330, 0
        %v355 = vsel %vm344, %v331, 0
        %v358 = vsel %vm344, %v332, 0
        %360 = vmatpush.bf16.msra.mxu0 0
        %361 = vmatpush.bf16.msra.mxu0 0
        %362 = vmatpush.bf16.msra.mxu0 0
        %363 = vmatpush.bf16.msra.mxu0 0
        %364 = vmatpush.bf16.msra.mxu0 0
        %365 = vmatpush.bf16.msra.mxu0 0
        %366 = vmatpush.bf16.msra.mxu0 0
        %367 = vmatpush.bf16.msra.mxu0 %v346
        %368 = vmatmul.bf16.gmra.mxu0 %v342
        %v369 = vpop.f32.mrf.mxu0
        %v370 = vadd.f32 0.0, %v369
        %v371 = vpop.f32.mrf.mxu0
        %v372 = vadd.f32 0.0, %v371
        %373 = vdwg.mxu0
        %374 = vmatpush.bf16.msra.mxu0 0
        %375 = vmatpush.bf16.msra.mxu0 0
        %376 = vmatpush.bf16.msra.mxu0 0
        %377 = vmatpush.bf16.msra.mxu0 0
        %378 = vmatpush.bf16.msra.mxu0 0
        %379 = vmatpush.bf16.msra.mxu0 0
        %380 = vmatpush.bf16.msra.mxu0 0
        %381 = vmatpush.bf16.msra.mxu0 %v349
        %382 = vmatmul.bf16.gmra.mxu0 %v342
        %v383 = vpop.f32.mrf.mxu0
        %v384 = vadd.f32 0.0, %v383
        %v385 = vpop.f32.mrf.mxu0
        %v386 = vadd.f32 0.0, %v385
        %387 = vdwg.mxu0
        %388 = vmatpush.bf16.msra.mxu0 0
        %389 = vmatpush.bf16.msra.mxu0 0
        %390 = vmatpush.bf16.msra.mxu0 0
        %391 = vmatpush.bf16.msra.mxu0 0
        %392 = vmatpush.bf16.msra.mxu0 0
        %393 = vmatpush.bf16.msra.mxu0 0
        %394 = vmatpush.bf16.msra.mxu0 0
        %395 = vmatpush.bf16.msra.mxu0 %v352
        %396 = vmatmul.bf16.gmra.mxu0 %v342
        %v397 = vpop.f32.mrf.mxu0
        %v398 = vadd.f32 0.0, %v397
        %v399 = vpop.f32.mrf.mxu0
        %v400 = vadd.f32 0.0, %v399
        %401 = vdwg.mxu0
        %402 = vmatpush.bf16.msra.mxu0 0
        %403 = vmatpush.bf16.msra.mxu0 0
        %404 = vmatpush.bf16.msra.mxu0 0
        %405 = vmatpush.bf16.msra.mxu0 0
        %406 = vmatpush.bf16.msra.mxu0 0
        %407 = vmatpush.bf16.msra.mxu0 0
        %408 = vmatpush.bf16.msra.mxu0 0
        %409 = vmatpush.bf16.msra.mxu0 %v355
        %410 = vmatmul.bf16.gmra.mxu0 %v342
        %v411 = vpop.f32.mrf.mxu0
        %v412 = vadd.f32 0.0, %v411
        %v413 = vpop.f32.mrf.mxu0
        %v414 = vadd.f32 0.0, %v413
        %415 = vdwg.mxu0
        %416 = vmatpush.bf16.msra.mxu0 0
        %417 = vmatpush.bf16.msra.mxu0 0
        %418 = vmatpush.bf16.msra.mxu0 0
        %419 = vmatpush.bf16.msra.mxu0 0
        %420 = vmatpush.bf16.msra.mxu0 0
        %421 = vmatpush.bf16.msra.mxu0 0
        %422 = vmatpush.bf16.msra.mxu0 0
        %423 = vmatpush.bf16.msra.mxu0 %v358
        %424 = vmatmul.bf16.gmra.mxu0 %v342
        %v425 = vpop.f32.mrf.mxu0
        %v426 = vadd.f32 0.0, %v425
        %v427 = vpop.f32.mrf.mxu0
        %v428 = vadd.f32 0.0, %v427
        %429 = vdwg.mxu0
        %v430 = vadd.f32 %v370, %v384
        %v431 = vadd.f32 %v430, %v398
        %v432 = vadd.f32 %v431, %v412
        %v433 = vadd.f32 %v432, %v426
        %434 = vadd.xlane.f32.xlu0 %v433
        %v435 = vpop.xlane.xlu0 %434
        %v436 = vadd.f32 %v372, %v386
        %v437 = vadd.f32 %v436, %v400
        %v438 = vadd.f32 %v437, %v414
        %v439 = vadd.f32 %v438, %v428
        %440 = vadd.xlane.f32.xlu0 %v439
        %v441 = vpop.xlane.xlu0 %440
        %vm442 = vcmask 7168
        %443 = vst.msk [vmem:[%s306] sm:$0xff] %vm442, %v435
        %444 = vst.msk [vmem:[%s306 + $0x8] sm:$0xff] %vm442, %v441
        %v445 = vmul.f32 %v370, %v370
        %v446 = vmul.f32 %v384, %v384
        %v447 = vmul.f32 %v398, %v398
        %v448 = vmul.f32 %v412, %v412
        %v449 = vmul.f32 %v426, %v426
        %v450 = vmul.f32 %v372, %v372
        %v451 = vmul.f32 %v386, %v386
        %v452 = vmul.f32 %v400, %v400
        %v453 = vmul.f32 %v414, %v414
        %v454 = vmul.f32 %v428, %v428
        %v455 = vadd.f32 %v445, %v446
        %v456 = vadd.f32 %v455, %v447
        %v457 = vadd.f32 %v456, %v448
        %v458 = vadd.f32 %v457, %v449
        %459 = vadd.xlane.f32.xlu0 %v458
        %v460 = vpop.xlane.xlu0 %459
        %v461 = vadd.f32 %v450, %v451
        %v462 = vadd.f32 %v461, %v452
        %v463 = vadd.f32 %v462, %v453
        %v464 = vadd.f32 %v463, %v454
        %465 = vadd.xlane.f32.xlu0 %v464
        %v466 = vpop.xlane.xlu0 %465
        %467 = vst.msk [vmem:[%s320] sm:$0xff] %vm442, %v460
        %468 = vst.msk [vmem:[%s320 + $0x8] sm:$0xff] %vm442, %v466
        %v469 = vpack.c.bf16 %v384, %v370
        %v470 = vpack.c.bf16 %v412, %v398
        %v471 = vpack.c.bf16 %v426, %v426
        %v472 = vpack.c.bf16 %v386, %v372
        %v473 = vpack.c.bf16 %v414, %v400
        %v474 = vpack.c.bf16 %v428, %v428
        %475 = vst [vmem:[%s245] sm:$0xff] %v469
        %476 = vst [vmem:[%s245 + $0x8] sm:$0xff] %v470
        %477 = vst [vmem:[%s245 + $0x10] sm:$0xf] %v471
        %478 = vst [vmem:[%s245 + $0x14] sm:$0xff] %v472
        %479 = vst [vmem:[%s245 + $0x1c] sm:$0xff] %v473
        %480 = vst [vmem:[%s245 + $0x24] sm:$0xf] %v474
        %s481 = sand.u32 %s101, 1
        %s482 = sand.u32 %s101, 1
        %s483 = smul.addr %s482, 40
        %s484 = scalar_lea.vmem [#allocation2], %s483
        %s485 = smul.u32 2, %s21
        %p486 = scmp.lt.s32.totalorder %s22, 1
        %s487 = scalar_select %p486, %s22, 1
        %p488 = scmp.lt.s32.totalorder %s23, 1
        %s489 = scalar_select %p488, %s23, 1
        %p490 = scmp.lt.s32.totalorder %s485, 1
        %s491 = scalar_select %p490, %s485, 1
        %s492 = smul.addr %s489, 2
        %s493 = sadd.s32 %s491, %s492
        %s494 = smul.addr %s487, 4
        %s495 = sadd.s32 %s493, %s494
        %s496 = smul.addr %s495, 8
        %s497 = scalar_lea.vmem %s3, %s496
        %s498 = smul.u32 2, %s21
        %p499 = scmp.lt.s32.totalorder %s22, 1
        %s500 = scalar_select %p499, %s22, 1
        %p501 = scmp.lt.s32.totalorder %s23, 1
        %s502 = scalar_select %p501, %s23, 1
        %p503 = scmp.lt.s32.totalorder %s498, 1
        %s504 = scalar_select %p503, %s498, 1
        %s505 = smul.addr %s502, 2
        %s506 = sadd.s32 %s504, %s505
        %s507 = smul.addr %s500, 4
        %s508 = sadd.s32 %s506, %s507
        %s509 = smul.addr %s508, 8
        %s510 = scalar_lea.vmem %s4, %s509
        // Predicated region
        $region29: #{_lambda_.2} parent=27 // pred_check
          %p511 = pneg %p111
        $region30: #{_lambda_.2} parent=27 // pred_check_branch
          %513 = sbr.rel (%p511) target = $region32
        $region31: #{_lambda_.2} parent=27 // pred_region
          %s514 = smul.u32 2, %s21
          %s515 = smul.u32 5, %s23
          %s516 = smul.addr %s514, 10
          %s517 = sadd.s32 %s515, %s516
          %s518 = smul.addr %s22, 20
          %s519 = sadd.s32 %s517, %s518
          %s520 = smul.addr %s519, 4
          %s521 = scalar_lea.vmem %s2, %s520
          // Predicated region
          $region33: #{_lambda_.2} parent=31 // pred_check
            _
          $region34: #{_lambda_.2} parent=31 // pred_check_branch
            %523 = sbr.rel (0) target = $region36
          $region35: #{_lambda_.2} parent=31 // pred_region
            // Predicated region
            $region37: #{_lambda_.2} parent=35 // pred_check
              _
            $region38: #{_lambda_.2} parent=35 // pred_check_branch
              %525 = sbr.rel (0) target = $region40
            $region39: #{_lambda_.2} parent=35 // pred_region
              %s526 = scalar_lea.vmem %s484, 16 [#allocation2]
              %s527 = scalar_lea.vmem %s521, 16
              loop: start=0, step=1, limit=1
              $region41: #{_lambda_.2} parent=39 // loop_pre_header
                _
              $region42: #{_lambda_.2} parent=39 // loop_header
                %s529 = sphi 0, %s533
                %p530 = scmp.ge.s32.totalorder %s529, 1
                %s534 = sphi %s484, %s484
                %s535 = sphi %s521, %s521
              $region43: #{_lambda_.2} parent=39 // loop_header_branch
                %532 = sbr.rel (%p530) target = $region47
              $region44: #{_lambda_.2} parent=39 // loop_body
                %v536 = vld [vmem:[%s534] sm:$0xff]
                %537 = vst [vmem:[%s535] sm:$0xff] %v536
                %v538 = vld [vmem:[%s534 + $0x8] sm:$0xff]
                %539 = vst [vmem:[%s535 + $0x8] sm:$0xff] %v538
                %v540 = vld [vmem:[%s534 + $0x14] sm:$0xff]
                %541 = vst [vmem:[%s535 + $0x28] sm:$0xff] %v540
                %v542 = vld [vmem:[%s534 + $0x1c] sm:$0xff]
                %543 = vst [vmem:[%s535 + $0x30] sm:$0xff] %v542
              $region45: #{_lambda_.2} parent=39 // loop_footer
                %s533 = sadd.s32 1, %s529
              $region46: #{_lambda_.2} parent=39 // loop_footer_branch
                %528 = sbr.rel target = $region42
              $region47: #{_lambda_.2} parent=39 // loop_exit
                _
              %s545 = ssub.s32 16, 1
              loop: start=0, step=1, limit=1
              $region48: #{_lambda_.2} parent=39 // loop_pre_header
                _
              $region49: #{_lambda_.2} parent=39 // loop_header
                %s547 = sphi 0, %s551
                %p548 = scmp.ge.s32.totalorder %s547, 1
                %s552 = sphi %s526, %s526
                %s553 = sphi %s527, %s527
              $region50: #{_lambda_.2} parent=39 // loop_header_branch
                %550 = sbr.rel (%p548) target = $region54
              $region51: #{_lambda_.2} parent=39 // loop_body
                %v554 = vld [vmem:[%s552] sm:%s545]
                %555 = vst [vmem:[%s553] sm:%s545] %v554
                %v556 = vld [vmem:[%s552 + $0x14] sm:%s545]
                %557 = vst [vmem:[%s553 + $0x28] sm:%s545] %v556
              $region52: #{_lambda_.2} parent=39 // loop_footer
                %s551 = sadd.s32 1, %s547
              $region53: #{_lambda_.2} parent=39 // loop_footer_branch
                %546 = sbr.rel target = $region49
              $region54: #{_lambda_.2} parent=39 // loop_exit
                _
            $region40: #{_lambda_.2} parent=35 // pred_fallthru
              _
          $region36: #{_lambda_.2} parent=31 // pred_fallthru
            _
          %558 = vnop
        $region32: #{_lambda_.2} parent=27 // pred_fallthru
          _
        // Predicated region
        $region55: #{_lambda_.2} parent=27 // pred_check
          %p559 = pneg %p141
        $region56: #{_lambda_.2} parent=27 // pred_check_branch
          %561 = sbr.rel (%p559) target = $region58
        $region57: #{_lambda_.2} parent=27 // pred_region
          %s562 = smul.u32 2, %s21
        $region58: #{_lambda_.2} parent=27 // pred_fallthru
          _
        // Predicated region
        $region59: #{_lambda_.2} parent=27 // pred_check
          %p563 = pneg %p171
        $region60: #{_lambda_.2} parent=27 // pred_check_branch
          %565 = sbr.rel (%p563) target = $region62
        $region61: #{_lambda_.2} parent=27 // pred_region
          %s566 = smul.u32 2, %s21
        $region62: #{_lambda_.2} parent=27 // pred_fallthru
          _
      $region28: #{_lambda_.2} parent=5 // pred_fallthru
        _
      %p567 = scmp.le.s32.totalorder 2, %s11
      // Predicated region
      $region63: #{_lambda_.2} parent=5 // pred_check
        %p568 = pneg %p567
      $region64: #{_lambda_.2} parent=5 // pred_check_branch
        %570 = sbr.rel (%p568) target = $region66
      $region65: #{_lambda_.2} parent=5 // pred_region
        %s571 = ssub.s32 %s11, 2
        // Predicated region
        $region67: #{_lambda_.2} parent=65 // pred_check
          %p572 = pneg %p117
        $region68: #{_lambda_.2} parent=65 // pred_check_branch
          %574 = sbr.rel (%p572) target = $region70
        $region69: #{_lambda_.2} parent=65 // pred_region
          %s575 = sand.u32 %s102, 1
          %s576 = sand.u32 %s102, 1
          %s577 = smul.addr %s576, 40
          %s578 = scalar_lea.vmem [#allocation2], %s577
        $region70: #{_lambda_.2} parent=65 // pred_fallthru
          _
        // Predicated region
        $region71: #{_lambda_.2} parent=65 // pred_check
          %p579 = pneg %p147
        $region72: #{_lambda_.2} parent=65 // pred_check_branch
          %581 = sbr.rel (%p579) target = $region74
        $region73: #{_lambda_.2} parent=65 // pred_region
          %s582 = smul.u32 2, %s24
          %p583 = scmp.lt.s32.totalorder %s25, 1
          %s584 = scalar_select %p583, %s25, 1
          %p585 = scmp.lt.s32.totalorder %s26, 1
          %s586 = scalar_select %p585, %s26, 1
          %p587 = scmp.lt.s32.totalorder %s582, 1
          %s588 = scalar_select %p587, %s582, 1
          %s589 = smul.addr %s586, 2
          %s590 = sadd.s32 %s588, %s589
          %s591 = smul.addr %s584, 4
          %s592 = sadd.s32 %s590, %s591
          %s593 = smul.addr %s592, 8
          %s594 = scalar_lea.vmem %s3, %s593
        $region74: #{_lambda_.2} parent=65 // pred_fallthru
          _
        // Predicated region
        $region75: #{_lambda_.2} parent=65 // pred_check
          %p595 = pneg %p177
        $region76: #{_lambda_.2} parent=65 // pred_check_branch
          %597 = sbr.rel (%p595) target = $region78
        $region77: #{_lambda_.2} parent=65 // pred_region
          %s598 = smul.u32 2, %s24
          %p599 = scmp.lt.s32.totalorder %s25, 1
          %s600 = scalar_select %p599, %s25, 1
          %p601 = scmp.lt.s32.totalorder %s26, 1
          %s602 = scalar_select %p601, %s26, 1
          %p603 = scmp.lt.s32.totalorder %s598, 1
          %s604 = scalar_select %p603, %s598, 1
          %s605 = smul.addr %s602, 2
          %s606 = sadd.s32 %s604, %s605
          %s607 = smul.addr %s600, 4
          %s608 = sadd.s32 %s606, %s607
          %s609 = smul.addr %s608, 8
          %s610 = scalar_lea.vmem %s4, %s609
        $region78: #{_lambda_.2} parent=65 // pred_fallthru
          _
      $region66: #{_lambda_.2} parent=5 // pred_fallthru
        _
    $region6: #{_lambda_.2} parent=1 // loop_footer
      %s15 = sadd.s32 1, %s11
    $region7: #{_lambda_.2} parent=1 // loop_footer_branch
      %10 = sbr.rel target = $region3
    $region8: #{_lambda_.2} parent=1 // loop_exit
      _

// kernel: _lambda_.3
$region0: #{_lambda_.3}
  #allocation0 [shape = 'u32[]', space=smem, size = 0x4, offset = 0x4, fixed_abs, tag = 'smem constant byte address 0x4 - core index']
  #allocation1 [shape = 'u32[72,128]{1,0:T(1,128)}', space=vmem, size = 0x9000, scoped, tag = 'internal scratch']
  %s0 = inlined_call_operand.vmem [shape: bf16[2,16,1280], index: 0, kind: input, shape index: {}]
  %s1 = inlined_call_operand.vmem [shape: f32[16,1], index: 1, kind: input, shape index: {}]
  %s2 = inlined_call_operand.vmem [shape: f32[16,1], index: 2, kind: input, shape index: {}]
  %s3 = inlined_call_operand.vmem [shape: f32[2,16,1280], index: 3, kind: output, shape index: {}]
  %s4 = sld [smem:[#allocation0]]
  $region90: #{_lambda_.3} parent=0
    _
  %s6 = ssub.s32 1, %s4
  %s7 = scalar_select 0, %s6, %s4
  $region1: #{_lambda_.3} parent=0
    #allocation2 [shape = 'u8[40960]{0}', space=vmem, size = 0xa000, scoped, tag = 'input window, operand 0']
    #allocation3 [shape = 'u8[81920]{0}', space=vmem, size = 0x14000, scoped, tag = 'output window, operand 0']
    loop: start=0, step=1, limit=6
    $region2: #{_lambda_.3} parent=1 // loop_pre_header
      _
    $region3: #{_lambda_.3} parent=1 // loop_header
      %s9 = sphi 0, %s13
      %p10 = scmp.ge.s32.totalorder %s9, 6
      %s16 = sphi 0, %s35
      %s17 = sphi 0, %s31
      %s18 = sphi 0, %s27
      %s19 = sphi 0, %s16
      %s20 = sphi 0, %s17
      %s21 = sphi 0, %s18
      %s22 = sphi 0, %s19
      %s23 = sphi 0, %s20
      %s24 = sphi 0, %s21
      %s42 = sphi 0, %s44
      %s45 = sphi 0, %s42
      %s46 = sphi 0, %s45
      %s62 = sphi 0, %s46
      %s68 = sphi 0, %s70
      %s71 = sphi 0, %s68
      %s72 = sphi 0, %s71
      %s88 = sphi 0, %s72
      %s94 = sphi 0, %s96
      %s97 = sphi 0, %s94
      %s98 = sphi 0, %s97
      %s114 = sphi 0, %s98
      %s124 = sphi 0, %s126
      %s127 = sphi 0, %s124
      %s128 = sphi 0, %s127
      %s144 = sphi 0, %s128
    $region4: #{_lambda_.3} parent=1 // loop_header_branch
      %12 = sbr.rel (%p10) target = $region8
    $region5: #{_lambda_.3} parent=1 // loop_body
      %s14 = ssub.s32 %s9, 1
      %s15 = ssub.s32 %s9, 2
      %s25 = sadd.s32 1, %s18
      %p26 = scmp.ge.s32.totalorder %s25, 2
      %s27 = scalar_select %p26, 0, %s25
      %s28 = sadd.s32 1, %s17
      %s29 = scalar_select %p26, %s28, %s17
      %p30 = scmp.ge.s32.totalorder %s29, 2
      %s31 = scalar_select %p30, 0, %s29
      %s32 = sadd.s32 1, %s16
      %s33 = scalar_select %p30, %s32, %s16
      %p34 = scmp.ge.s32.totalorder %s33, 1
      %s35 = scalar_select %p34, 0, %s33
      %s36 = ssub.s32 %s17, %s31
      %s37 = ssub.s32 %s16, %s35
      %s38 = sor.u32 %s36, %s37
      %s39 = ssub.s32 %s18, %s27
      %s40 = sor.u32 %s38, %s39
      %p41 = scmp.eq.s32.totalorder %s40, 0
      %s43 = sadd.s32 %s42, 1
      %s44 = scalar_select %p41, %s42, %s43
      %p47 = pneg %p41
      %p48 = scmp.eq.s32.totalorder %s9, 3
      %p49 = por %p47, %p48
      %p50 = scmp.ne.s32.totalorder %s42, %s45
      %p51 = scmp.eq.s32.totalorder %s9, 0
      %p52 = por %p50, %p51
      %p53 = scmp.ne.s32.totalorder %s42, %s45
      %p54 = scmp.eq.s32.totalorder %s14, 3
      %p55 = por %p53, %p54
      %p56 = scmp.ne.s32.totalorder %s45, %s46
      %p57 = scmp.eq.s32.totalorder %s14, 0
      %p58 = por %p56, %p57
      %p59 = scmp.ne.s32.totalorder %s45, %s46
      %p60 = scmp.eq.s32.totalorder %s15, 3
      %p61 = por %p59, %p60
      %p63 = scmp.ne.s32.totalorder %s46, %s62
      %p64 = scmp.eq.s32.totalorder %s15, 0
      %p65 = por %p63, %p64
      %s66 = ssub.s32 %s16, %s35
      %p67 = scmp.eq.s32.totalorder %s66, 0
      %s69 = sadd.s32 %s68, 1
      %s70 = scalar_select %p67, %s68, %s69
      %p73 = pneg %p67
      %p74 = scmp.eq.s32.totalorder %s9, 3
      %p75 = por %p73, %p74
      %p76 = scmp.ne.s32.totalorder %s68, %s71
      %p77 = scmp.eq.s32.totalorder %s9, 0
      %p78 = por %p76, %p77
      %p79 = scmp.ne.s32.totalorder %s68, %s71
      %p80 = scmp.eq.s32.totalorder %s14, 3
      %p81 = por %p79, %p80
      %p82 = scmp.ne.s32.totalorder %s71, %s72
      %p83 = scmp.eq.s32.totalorder %s14, 0
      %p84 = por %p82, %p83
      %p85 = scmp.ne.s32.totalorder %s71, %s72
      %p86 = scmp.eq.s32.totalorder %s15, 3
      %p87 = por %p85, %p86
      %p89 = scmp.ne.s32.totalorder %s72, %s88
      %p90 = scmp.eq.s32.totalorder %s15, 0
      %p91 = por %p89, %p90
      %s92 = ssub.s32 %s16, %s35
      %p93 = scmp.eq.s32.totalorder %s92, 0
      %s95 = sadd.s32 %s94, 1
      %s96 = scalar_select %p93, %s94, %s95
      %p99 = pneg %p93
      %p100 = scmp.eq.s32.totalorder %s9, 3
      %p101 = por %p99, %p100
      %p102 = scmp.ne.s32.totalorder %s94, %s97
      %p103 = scmp.eq.s32.totalorder %s9, 0
      %p104 = por %p102, %p103
      %p105 = scmp.ne.s32.totalorder %s94, %s97
      %p106 = scmp.eq.s32.totalorder %s14, 3
      %p107 = por %p105, %p106
      %p108 = scmp.ne.s32.totalorder %s97, %s98
      %p109 = scmp.eq.s32.totalorder %s14, 0
      %p110 = por %p108, %p109
      %p111 = scmp.ne.s32.totalorder %s97, %s98
      %p112 = scmp.eq.s32.totalorder %s15, 3
      %p113 = por %p111, %p112
      %p115 = scmp.ne.s32.totalorder %s98, %s114
      %p116 = scmp.eq.s32.totalorder %s15, 0
      %p117 = por %p115, %p116
      %s118 = ssub.s32 %s17, %s31
      %s119 = ssub.s32 %s16, %s35
      %s120 = sor.u32 %s118, %s119
      %s121 = ssub.s32 %s18, %s27
      %s122 = sor.u32 %s120, %s121
      %p123 = scmp.eq.s32.totalorder %s122, 0
      %s125 = sadd.s32 %s124, 1
      %s126 = scalar_select %p123, %s124, %s125
      %p129 = pneg %p123
      %p130 = scmp.eq.s32.totalorder %s9, 3
      %p131 = por %p129, %p130
      %p132 = scmp.ne.s32.totalorder %s124, %s127
      %p133 = scmp.eq.s32.totalorder %s9, 0
      %p134 = por %p132, %p133
      %p135 = scmp.ne.s32.totalorder %s124, %s127
      %p136 = scmp.eq.s32.totalorder %s14, 3
      %p137 = por %p135, %p136
      %p138 = scmp.ne.s32.totalorder %s127, %s128
      %p139 = scmp.eq.s32.totalorder %s14, 0
      %p140 = por %p138, %p139
      %p141 = scmp.ne.s32.totalorder %s127, %s128
      %p142 = scmp.eq.s32.totalorder %s15, 3
      %p143 = por %p141, %p142
      %p145 = scmp.ne.s32.totalorder %s128, %s144
      %p146 = scmp.eq.s32.totalorder %s15, 0
      %p147 = por %p145, %p146
      %p148 = scmp.le.s32.totalorder 1, %s9
      %p149 = scmp.lt.s32.totalorder %s9, 5
      %p150 = pnand %p148, %p149
      %p151 = pneg %p150
      // Predicated region
      $region9: #{_lambda_.3} parent=5 // pred_check
        _
      $region10: #{_lambda_.3} parent=5 // pred_check_branch
        %153 = sbr.rel (%p150) target = $region12
      $region11: #{_lambda_.3} parent=5 // pred_region
        %s154 = ssub.s32 %s9, 1
        // Predicated region
        $region13: #{_lambda_.3} parent=11 // pred_check
          %p155 = pneg %p84
        $region14: #{_lambda_.3} parent=11 // pred_check_branch
          %157 = sbr.rel (%p155) target = $region16
        $region15: #{_lambda_.3} parent=11 // pred_region
          %s158 = smul.u32 2, %s19
          %p159 = scmp.lt.s32.totalorder %s158, 1
          %s160 = scalar_select %p159, %s158, 1
          %s161 = smul.addr %s160, 8
          %s162 = scalar_lea.vmem %s1, %s161
          %s163 = smul.u32 2, %s19
        $region16: #{_lambda_.3} parent=11 // pred_fallthru
          _
        // Predicated region
        $region17: #{_lambda_.3} parent=11 // pred_check
          %p164 = pneg %p110
        $region18: #{_lambda_.3} parent=11 // pred_check_branch
          %166 = sbr.rel (%p164) target = $region20
        $region19: #{_lambda_.3} parent=11 // pred_region
          %s167 = smul.u32 2, %s19
          %p168 = scmp.lt.s32.totalorder %s167, 1
          %s169 = scalar_select %p168, %s167, 1
          %s170 = smul.addr %s169, 8
          %s171 = scalar_lea.vmem %s2, %s170
          %s172 = smul.u32 2, %s19
        $region20: #{_lambda_.3} parent=11 // pred_fallthru
          _
      $region12: #{_lambda_.3} parent=5 // pred_fallthru
        _
      %p173 = scmp.lt.s32.totalorder %s9, 4
      // Predicated region
      $region21: #{_lambda_.3} parent=5 // pred_check
        %p174 = pneg %p173
      $region22: #{_lambda_.3} parent=5 // pred_check_branch
        %176 = sbr.rel (%p174) target = $region24
      $region23: #{_lambda_.3} parent=5 // pred_region
        // Predicated region
        $region25: #{_lambda_.3} parent=23 // pred_check
          %p177 = pneg %p52
        $region26: #{_lambda_.3} parent=23 // pred_check_branch
          %179 = sbr.rel (%p177) target = $region28
        $region27: #{_lambda_.3} parent=23 // pred_region
          %s180 = sand.u32 %s42, 1
          %s181 = sand.u32 %s42, 1
          %s182 = smul.addr %s181, 40
          %s183 = scalar_lea.vmem [#allocation2], %s182
          %s184 = smul.u32 2, %s16
          %s185 = smul.u32 5, %s18
          %s186 = smul.addr %s184, 10
          %s187 = sadd.s32 %s185, %s186
          %s188 = smul.addr %s17, 20
          %s189 = sadd.s32 %s187, %s188
          %s190 = smul.addr %s189, 4
          %s191 = scalar_lea.vmem %s0, %s190
          // Predicated region
          $region29: #{_lambda_.3} parent=27 // pred_check
            _
          $region30: #{_lambda_.3} parent=27 // pred_check_branch
            %193 = sbr.rel (0) target = $region32
          $region31: #{_lambda_.3} parent=27 // pred_region
            // Predicated region
            $region33: #{_lambda_.3} parent=31 // pred_check
              _
            $region34: #{_lambda_.3} parent=31 // pred_check_branch
              %195 = sbr.rel (0) target = $region36
            $region35: #{_lambda_.3} parent=31 // pred_region
              %s196 = scalar_lea.vmem %s191, 16
              %s197 = scalar_lea.vmem %s183, 16 [#allocation2]
              loop: start=0, step=1, limit=1
              $region37: #{_lambda_.3} parent=35 // loop_pre_header
                _
              $region38: #{_lambda_.3} parent=35 // loop_header
                %s199 = sphi 0, %s203
                %p200 = scmp.ge.s32.totalorder %s199, 1
                %s204 = sphi %s191, %s191
                %s205 = sphi %s183, %s183
              $region39: #{_lambda_.3} parent=35 // loop_header_branch
                %202 = sbr.rel (%p200) target = $region43
              $region40: #{_lambda_.3} parent=35 // loop_body
                %v206 = vld [vmem:[%s204] sm:$0xff]
                %207 = vst [vmem:[%s205] sm:$0xff] %v206
                %v208 = vld [vmem:[%s204 + $0x8] sm:$0xff]
                %209 = vst [vmem:[%s205 + $0x8] sm:$0xff] %v208
                %v210 = vld [vmem:[%s204 + $0x28] sm:$0xff]
                %211 = vst [vmem:[%s205 + $0x14] sm:$0xff] %v210
                %v212 = vld [vmem:[%s204 + $0x30] sm:$0xff]
                %213 = vst [vmem:[%s205 + $0x1c] sm:$0xff] %v212
              $region41: #{_lambda_.3} parent=35 // loop_footer
                %s203 = sadd.s32 1, %s199
              $region42: #{_lambda_.3} parent=35 // loop_footer_branch
                %198 = sbr.rel target = $region38
              $region43: #{_lambda_.3} parent=35 // loop_exit
                _
              %s215 = ssub.s32 16, 1
              loop: start=0, step=1, limit=1
              $region44: #{_lambda_.3} parent=35 // loop_pre_header
                _
              $region45: #{_lambda_.3} parent=35 // loop_header
                %s217 = sphi 0, %s221
                %p218 = scmp.ge.s32.totalorder %s217, 1
                %s222 = sphi %s196, %s196
                %s223 = sphi %s197, %s197
              $region46: #{_lambda_.3} parent=35 // loop_header_branch
                %220 = sbr.rel (%p218) target = $region50
              $region47: #{_lambda_.3} parent=35 // loop_body
                %v224 = vld [vmem:[%s222] sm:%s215]
                %225 = vst [vmem:[%s223] sm:%s215] %v224
                %v226 = vld [vmem:[%s222 + $0x28] sm:%s215]
                %227 = vst [vmem:[%s223 + $0x14] sm:%s215] %v226
              $region48: #{_lambda_.3} parent=35 // loop_footer
                %s221 = sadd.s32 1, %s217
              $region49: #{_lambda_.3} parent=35 // loop_footer_branch
                %216 = sbr.rel target = $region45
              $region50: #{_lambda_.3} parent=35 // loop_exit
                _
            $region36: #{_lambda_.3} parent=31 // pred_fallthru
              _
          $region32: #{_lambda_.3} parent=27 // pred_fallthru
            _
          %228 = vnop
        $region28: #{_lambda_.3} parent=23 // pred_fallthru
          _
      $region24: #{_lambda_.3} parent=5 // pred_fallthru
        _
      %p229 = scmp.le.s32.totalorder 1, %s9
      %p230 = scmp.lt.s32.totalorder %s9, 5
      %p231 = pnand %p229, %p230
      %p232 = pneg %p231
      // Predicated region
      $region51: #{_lambda_.3} parent=5 // pred_check
        _
      $region52: #{_lambda_.3} parent=5 // pred_check_branch
        %234 = sbr.rel (%p231) target = $region54
      $region53: #{_lambda_.3} parent=5 // pred_region
        %s235 = ssub.s32 %s9, 1
        %s236 = sand.u32 %s45, 1
        %s237 = sand.u32 %s45, 1
        %s238 = smul.addr %s237, 40
        %s239 = scalar_lea.vmem [#allocation2], %s238
        // Predicated region
        $region55: #{_lambda_.3} parent=53 // pred_check
          %p240 = pneg %p58
        $region56: #{_lambda_.3} parent=53 // pred_check_branch
          %242 = sbr.rel (%p240) target = $region58
        $region57: #{_lambda_.3} parent=53 // pred_region
          _
        $region58: #{_lambda_.3} parent=53 // pred_fallthru
          _
        %s243 = sand.u32 %s45, 1
        %s244 = sand.u32 %s45, 1
        %s245 = smul.addr %s244, 40
        %s246 = scalar_lea.vmem [#allocation2], %s245
        %p247 = pneg %p58
        %p248 = pneg %p55
        %s249 = smul.u32 2, %s19
        %p250 = scmp.lt.s32.totalorder %s249, 1
        %s251 = scalar_select %p250, %s249, 1
        %s252 = smul.addr %s251, 8
        %s253 = scalar_lea.vmem %s1, %s252
        %p254 = pneg %p84
        %p255 = pneg %p81
        %s256 = smul.u32 2, %s19
        %p257 = scmp.lt.s32.totalorder %s256, 1
        %s258 = scalar_select %p257, %s256, 1
        %s259 = smul.addr %s258, 8
        %s260 = scalar_lea.vmem %s2, %s259
        %p261 = pneg %p110
        %p262 = pneg %p107
        %p263 = pneg %p140
        %p264 = pneg %p137
        %s265 = sand.u32 %s127, 1
        %s266 = sand.u32 %s127, 1
        %s267 = smul.addr %s266, 80
        %s268 = scalar_lea.vmem [#allocation3], %s267
        %s269 = smul.u32 2, %s19
        %s270 = smul.u32 5, %s21
        %s271 = smul.u32 2, %s19
        %p272 = scmp.lt.s32.totalorder %s271, 1
        %s273 = scalar_select %p272, %s271, 1
        %s274 = smul.addr %s273, 8
        %s275 = scalar_lea.vmem %s1, %s274
        %s276 = smul.u32 2, %s19
        %s277 = smul.u32 2, %s19
        %p278 = scmp.lt.s32.totalorder %s277, 1
        %s279 = scalar_select %p278, %s277, 1
        %s280 = smul.addr %s279, 8
        %s281 = scalar_lea.vmem %s2, %s280
        %s282 = smul.u32 2, %s19
        %s283 = smul.u32 2, %s19
        %s284 = smul.u32 5, %s21
        %v285 = vld [vmem:[%s239] sm:$0xff]
        %v286 = vld [vmem:[%s239 + $0x8] sm:$0xff]
        %v287 = vld [vmem:[%s239 + $0x10] sm:$0xf]
        %v288 = vld [vmem:[%s239 + $0x14] sm:$0xff]
        %v289 = vld [vmem:[%s239 + $0x1c] sm:$0xff]
        %v290 = vld [vmem:[%s239 + $0x24] sm:$0xf]
        %v291 = vunpack.c.l.bf16 %v285
        %v292 = vunpack.c.h.bf16 %v285
        %v293 = vunpack.c.l.bf16 %v286
        %v294 = vunpack.c.h.bf16 %v286
        %v295 = vunpack.c.l.bf16 %v287
        %v296 = vunpack.c.l.bf16 %v288
        %v297 = vunpack.c.h.bf16 %v288
        %v298 = vunpack.c.l.bf16 %v289
        %v299 = vunpack.c.h.bf16 %v289
        %v300 = vunpack.c.l.bf16 %v290
        %v301 = vld [vmem:[%s275] sm:$0xff]
        %v302 = vld [vmem:[%s275 + $0x8] sm:$0xff]
        %304 = vset.pattern.permute.xlu0 0
        %305 = vperm.xlu0 %304, %v301
        %v306 = vpop.permute.xlu0 %305
        %309 = vset.pattern.permute.xlu0 0
        %310 = vperm.xlu0 %309, %v302
        %v311 = vpop.permute.xlu0 %310
        %v313 = vmul.f32 %v291, %v306
        %v314 = vmul.f32 %v292, %v306
        %v315 = vmul.f32 %v293, %v306
        %v316 = vmul.f32 %v294, %v306
        %v317 = vmul.f32 %v295, %v306
        %v318 = vmul.f32 %v296, %v311
        %v319 = vmul.f32 %v297, %v311
        %v320 = vmul.f32 %v298, %v311
        %v321 = vmul.f32 %v299, %v311
        %v322 = vmul.f32 %v300, %v311
        %v323 = vld [vmem:[%s281] sm:$0xff]
        %v324 = vld [vmem:[%s281 + $0x8] sm:$0xff]
        %326 = vset.pattern.permute.xlu0 0
        %327 = vperm.xlu0 %326, %v323
        %v328 = vpop.permute.xlu0 %327
        %331 = vset.pattern.permute.xlu0 0
        %332 = vperm.xlu0 %331, %v324
        %v333 = vpop.permute.xlu0 %332
        %v335 = vadd.f32 %v313, %v328
        %v336 = vadd.f32 %v314, %v328
        %v337 = vadd.f32 %v315, %v328
        %v338 = vadd.f32 %v316, %v328
        %v339 = vadd.f32 %v317, %v328
        %v340 = vadd.f32 %v318, %v333
        %v341 = vadd.f32 %v319, %v333
        %v342 = vadd.f32 %v320, %v333
        %v343 = vadd.f32 %v321, %v333
        %v344 = vadd.f32 %v322, %v333
        %v345 = vmax.f32 %v335, 0.0
        %v346 = vmax.f32 %v336, 0.0
        %v347 = vmax.f32 %v337, 0.0
        %v348 = vmax.f32 %v338, 0.0
        %v349 = vmax.f32 %v339, 0.0
        %v350 = vmax.f32 %v340, 0.0
        %v351 = vmax.f32 %v341, 0.0
        %v352 = vmax.f32 %v342, 0.0
        %v353 = vmax.f32 %v343, 0.0
        %v354 = vmax.f32 %v344, 0.0
        %355 = vst [vmem:[%s268] sm:$0xff] %v345
        %356 = vst [vmem:[%s268 + $0x8] sm:$0xff] %v346
        %357 = vst [vmem:[%s268 + $0x10] sm:$0xff] %v347
        %358 = vst [vmem:[%s268 + $0x18] sm:$0xff] %v348
        %359 = vst [vmem:[%s268 + $0x20] sm:$0xff] %v349
        %360 = vst [vmem:[%s268 + $0x28] sm:$0xff] %v350
        %361 = vst [vmem:[%s268 + $0x30] sm:$0xff] %v351
        %362 = vst [vmem:[%s268 + $0x38] sm:$0xff] %v352
        %363 = vst [vmem:[%s268 + $0x40] sm:$0xff] %v353
        %364 = vst [vmem:[%s268 + $0x48] sm:$0xff] %v354
        %s365 = sand.u32 %s127, 1
        %s366 = sand.u32 %s127, 1
        %s367 = smul.addr %s366, 80
        %s368 = scalar_lea.vmem [#allocation3], %s367
        // Predicated region
        $region59: #{_lambda_.3} parent=53 // pred_check
          %p369 = pneg %p137
        $region60: #{_lambda_.3} parent=53 // pred_check_branch
          %371 = sbr.rel (%p369) target = $region62
        $region61: #{_lambda_.3} parent=53 // pred_region
          %s372 = smul.u32 2, %s19
          %s373 = smul.u32 5, %s21
          %s374 = smul.addr %s372, 10
          %s375 = sadd.s32 %s373, %s374
          %s376 = smul.addr %s20, 20
          %s377 = sadd.s32 %s375, %s376
          %s378 = smul.addr %s377, 8
          %s379 = scalar_lea.vmem %s3, %s378
          // Predicated region
          $region63: #{_lambda_.3} parent=61 // pred_check
            _
          $region64: #{_lambda_.3} parent=61 // pred_check_branch
            %381 = sbr.rel (0) target = $region66
          $region65: #{_lambda_.3} parent=61 // pred_region
            // Predicated region
            $region67: #{_lambda_.3} parent=65 // pred_check
              _
            $region68: #{_lambda_.3} parent=65 // pred_check_branch
              %383 = sbr.rel (0) target = $region70
            $region69: #{_lambda_.3} parent=65 // pred_region
              loop: start=0, step=1, limit=1
              $region71: #{_lambda_.3} parent=69 // loop_pre_header
                _
              $region72: #{_lambda_.3} parent=69 // loop_header
                %s385 = sphi 0, %s389
                %p386 = scmp.ge.s32.totalorder %s385, 1
                %s390 = sphi %s368, %s368
                %s391 = sphi %s379, %s379
              $region73: #{_lambda_.3} parent=69 // loop_header_branch
                %388 = sbr.rel (%p386) target = $region77
              $region74: #{_lambda_.3} parent=69 // loop_body
                %v392 = vld [vmem:[%s390] sm:$0xff]
                %393 = vst [vmem:[%s391] sm:$0xff] %v392
                %v394 = vld [vmem:[%s390 + $0x8] sm:$0xff]
                %395 = vst [vmem:[%s391 + $0x8] sm:$0xff] %v394
                %v396 = vld [vmem:[%s390 + $0x10] sm:$0xff]
                %397 = vst [vmem:[%s391 + $0x10] sm:$0xff] %v396
                %v398 = vld [vmem:[%s390 + $0x18] sm:$0xff]
                %399 = vst [vmem:[%s391 + $0x18] sm:$0xff] %v398
                %v400 = vld [vmem:[%s390 + $0x20] sm:$0xff]
                %401 = vst [vmem:[%s391 + $0x20] sm:$0xff] %v400
                %v402 = vld [vmem:[%s390 + $0x28] sm:$0xff]
                %403 = vst [vmem:[%s391 + $0x50] sm:$0xff] %v402
                %v404 = vld [vmem:[%s390 + $0x30] sm:$0xff]
                %405 = vst [vmem:[%s391 + $0x58] sm:$0xff] %v404
                %v406 = vld [vmem:[%s390 + $0x38] sm:$0xff]
                %407 = vst [vmem:[%s391 + $0x60] sm:$0xff] %v406
                %v408 = vld [vmem:[%s390 + $0x40] sm:$0xff]
                %409 = vst [vmem:[%s391 + $0x68] sm:$0xff] %v408
                %v410 = vld [vmem:[%s390 + $0x48] sm:$0xff]
                %411 = vst [vmem:[%s391 + $0x70] sm:$0xff] %v410
              $region75: #{_lambda_.3} parent=69 // loop_footer
                %s389 = sadd.s32 1, %s385
              $region76: #{_lambda_.3} parent=69 // loop_footer_branch
                %384 = sbr.rel target = $region72
              $region77: #{_lambda_.3} parent=69 // loop_exit
                _
            $region70: #{_lambda_.3} parent=65 // pred_fallthru
              _
            // Predicated region
            $region78: #{_lambda_.3} parent=65 // pred_check
              _
            $region79: #{_lambda_.3} parent=65 // pred_check_branch
              %413 = sbr.rel target = $region81
            $region80: #{_lambda_.3} parent=65 // pred_region
              _
            $region81: #{_lambda_.3} parent=65 // pred_fallthru
              _
          $region66: #{_lambda_.3} parent=61 // pred_fallthru
            _
          %414 = vnop
        $region62: #{_lambda_.3} parent=53 // pred_fallthru
          _
      $region54: #{_lambda_.3} parent=5 // pred_fallthru
        _
      %p415 = scmp.le.s32.totalorder 2, %s9
      // Predicated region
      $region82: #{_lambda_.3} parent=5 // pred_check
        %p416 = pneg %p415
      $region83: #{_lambda_.3} parent=5 // pred_check_branch
        %418 = sbr.rel (%p416) target = $region85
      $region84: #{_lambda_.3} parent=5 // pred_region
        %s419 = ssub.s32 %s9, 2
        // Predicated region
        $region86: #{_lambda_.3} parent=84 // pred_check
          %p420 = pneg %p143
        $region87: #{_lambda_.3} parent=84 // pred_check_branch
          %422 = sbr.rel (%p420) target = $region89
        $region88: #{_lambda_.3} parent=84 // pred_region
          %s423 = sand.u32 %s128, 1
          %s424 = sand.u32 %s128, 1
          %s425 = smul.addr %s424, 80
          %s426 = scalar_lea.vmem [#allocation3], %s425
        $region89: #{_lambda_.3} parent=84 // pred_fallthru
          _
      $region85: #{_lambda_.3} parent=5 // pred_fallthru
        _
    $region6: #{_lambda_.3} parent=1 // loop_footer
      %s13 = sadd.s32 1, %s9
    $region7: #{_lambda_.3} parent=1 // loop_footer_branch
      %8 = sbr.rel target = $region3
    $region8: #{_lambda_.3} parent=1 // loop_exit
      _

</llo_original>
